<compile_context>
chip_gen: v7x
topology: tpu7x:2x2x1
jax: 0.10.0
libtpu: 0.0.40
codegen_flags: <defaults>
</compile_context>

<pallas_src>
import functools

import jax
import jax.numpy as jnp
from jax.experimental import pallas as pl
from jax.experimental.pallas import tpu as pltpu

LANE = 128


def _round_up(n, m):
    return ((n + m - 1) // m) * m


def qvalue_kernel(x_ref, a_ref, w1x_ref, w1a_ref, b1_ref, w2_ref, b2_ref,
                  out_ref):
    # fc1 split across the concat boundary (no concatenate needed) -----------
    h = jnp.dot(x_ref[...], w1x_ref[...], preferred_element_type=jnp.float32)
    h = h + jnp.dot(a_ref[...], w1a_ref[...],
                    preferred_element_type=jnp.float32)
    h = h + b1_ref[...]
    h = jnp.maximum(h, 0.0)
    # fc2 into a lane-dense 128-wide slab (only column 0 carries the result) -
    out_ref[...] = (jnp.dot(h, w2_ref[...],
                            preferred_element_type=jnp.float32)
                    + b2_ref[...])


def prepare_params(params, state_dim):
    """Split fc1 weights at the concat boundary and pad to lane-dense shapes.

    params: (w1, b1, w2, b2) with
        w1: (state_dim + action_dim, hidden)   b1: (1, hidden)
        w2: (hidden, 1)                        b2: (1, 1)
    Returns (w1x, w1a, b1p, w2p, b2p) with hidden padded to a multiple of 128
    and the fc2 output padded to 128 lanes (zeros everywhere but column 0).
    """
    w1, b1, w2, b2 = params
    hidden = w1.shape[1]
    hp = _round_up(hidden, LANE)

    def pad_cols(m, cols):
        return jnp.pad(m, ((0, 0), (0, cols - m.shape[1])))

    w1x = pad_cols(w1[:state_dim], hp)            # (state_dim, Hp)
    w1a = pad_cols(w1[state_dim:], hp)            # (action_dim, Hp)
    b1p = pad_cols(b1, hp)                        # (1, Hp)
    w2p = jnp.zeros((hp, LANE), jnp.float32).at[:hidden, 0:1].set(w2)
    b2p = jnp.zeros((1, LANE), jnp.float32).at[0:1, 0:1].set(b2)
    return w1x, w1a, b1p, w2p, b2p


@functools.partial(jax.jit, static_argnames=("tile_b",))
def qvalue_forward(x, a, prepared, *, tile_b=512):
    """x: (B, state_dim), a: (B, action_dim) -> (B, 1)."""
    w1x, w1a, b1p, w2p, b2p = prepared
    B, state_dim = x.shape
    action_dim = a.shape[1]
    hp = w1x.shape[1]

    tb = min(tile_b, B)                 # block == full batch for small B
    grid = (pl.cdiv(B, tb),)

    out = pl.pallas_call(
        qvalue_kernel,
        out_shape=jax.ShapeDtypeStruct((B, LANE), jnp.float32),
        grid=grid,
        in_specs=[
            pl.BlockSpec((tb, state_dim), lambda i: (i, 0)),    # x (tiled)
            pl.BlockSpec((tb, action_dim), lambda i: (i, 0)),   # a (tiled)
            pl.BlockSpec((state_dim, hp), lambda i: (0, 0)),    # w1x resident
            pl.BlockSpec((action_dim, hp), lambda i: (0, 0)),   # w1a resident
            pl.BlockSpec((1, hp), lambda i: (0, 0)),            # b1 resident
            pl.BlockSpec((hp, LANE), lambda i: (0, 0)),         # w2 resident
            pl.BlockSpec((1, LANE), lambda i: (0, 0)),          # b2 resident
        ],
        out_specs=pl.BlockSpec((tb, LANE), lambda i: (i, 0)),
        compiler_params=pltpu.CompilerParams(
            dimension_semantics=("parallel",)),   # v7x: both TensorCores
    )(x, a, w1x, w1a, b1p, w2p, b2p)

    # TODO(synk): on v6e/v7x, casting x/a (and h) to bfloat16 roughly halves
    # HBM traffic for the dominant activation tensors; kept f32 here to match
    # the PyTorch module's float32 semantics exactly.
    return out[:, :1]                   # only column 0 is the real q-value


def init_params(key, state_dim, hidden_dim, action_dim):
    """Deterministic init mimicking torch.nn.Linear's U(-1/sqrt(fan_in), +)."""
    k1, k2, k3, k4 = jax.random.split(key, 4)
    in1 = state_dim + action_dim
    lim1 = 1.0 / jnp.sqrt(jnp.float32(in1))
    lim2 = 1.0 / jnp.sqrt(jnp.float32(hidden_dim))
    # stored as (in, out) = W.T relative to PyTorch's (out, in)
    w1 = jax.random.uniform(k1, (in1, hidden_dim), jnp.float32, -lim1, lim1)
    b1 = jax.random.uniform(k2, (1, hidden_dim), jnp.float32, -lim1, lim1)
    w2 = jax.random.uniform(k3, (hidden_dim, 1), jnp.float32, -lim2, lim2)
    b2 = jax.random.uniform(k4, (1, 1), jnp.float32, -lim2, lim2)
    return w1, b1, w2, b2


if __name__ == "__main__":
    # small shapes consistent with the module's forward
    batch, state_dim, action_dim, hidden_dim = 8, 16, 4, 32

    key = jax.random.PRNGKey(0)
    kx, ka, kp = jax.random.split(key, 3)
    x = jax.random.normal(kx, (batch, state_dim), jnp.float32)
    a = jax.random.normal(ka, (batch, action_dim), jnp.float32)
    params = init_params(kp, state_dim, hidden_dim, action_dim)

    prepared = prepare_params(params, state_dim)
    q = qvalue_forward(x, a, prepared)
    jax.block_until_ready(q)

    # sanity check against a pure-JAX reference of the same math
    w1, b1, w2, b2 = params
    cat = jnp.concatenate([x, a], axis=1)
    q_ref = jnp.maximum(cat @ w1 + b1, 0.0) @ w2 + b2
    assert q.shape == (batch, 1)
    assert jnp.allclose(q, q_ref, atol=1e-5, rtol=1e-5)

    print("KERNEL_OK")
</pallas_src>

<mosaic_0001>
module attributes {stable_mosaic.version = 11 : i64} {
  func.func @qvalue_kernel(%arg0: i32, %arg1: memref<8x16xf32, #tpu.memory_space<vmem>>, %arg2: memref<8x4xf32, #tpu.memory_space<vmem>>, %arg3: memref<16x128xf32, #tpu.memory_space<vmem>>, %arg4: memref<4x128xf32, #tpu.memory_space<vmem>>, %arg5: memref<1x128xf32, #tpu.memory_space<vmem>>, %arg6: memref<128x128xf32, #tpu.memory_space<vmem>>, %arg7: memref<1x128xf32, #tpu.memory_space<vmem>>, %arg8: memref<8x128xf32, #tpu.memory_space<vmem>>) attributes {dimension_semantics = [#tpu.dimension_semantics<parallel>], iteration_bounds = array<i64: 1>, scalar_prefetch = 0 : i64, scratch_operands = 0 : i64, tpu.core_type = #tpu.core_type<tc>, window_params = [{transform_indices = @transform_0, window_bounds = array<i64: 8, 16>}, {transform_indices = @transform_1, window_bounds = array<i64: 8, 4>}, {pipeline_mode = #tpu.pipeline_mode<synchronous>, transform_indices = @transform_2, window_bounds = array<i64: 16, 128>}, {pipeline_mode = #tpu.pipeline_mode<synchronous>, transform_indices = @transform_3, window_bounds = array<i64: 4, 128>}, {pipeline_mode = #tpu.pipeline_mode<synchronous>, transform_indices = @transform_4, window_bounds = array<i64: 1, 128>}, {pipeline_mode = #tpu.pipeline_mode<synchronous>, transform_indices = @transform_5, window_bounds = array<i64: 128, 128>}, {pipeline_mode = #tpu.pipeline_mode<synchronous>, transform_indices = @transform_6, window_bounds = array<i64: 1, 128>}, {transform_indices = @transform_7, window_bounds = array<i64: 8, 128>}]} {
    %c0 = arith.constant 0 : index
    %c0_0 = arith.constant 0 : index
    %0 = vector.load %arg1[%c0, %c0_0] : memref<8x16xf32, #tpu.memory_space<vmem>>, vector<8x16xf32>
    %c0_1 = arith.constant 0 : index
    %c0_2 = arith.constant 0 : index
    %1 = vector.load %arg3[%c0_1, %c0_2] : memref<16x128xf32, #tpu.memory_space<vmem>>, vector<16x128xf32>
    %cst = arith.constant dense<0.000000e+00> : vector<8x128xf32>
    %2 = tpu.matmul %0, %1, %cst {dimension_numbers = #tpu.dot_dimension_numbers<[1], [0], [0], [1], [0, 0, 1, 1], [], []>} : vector<8x16xf32>, vector<16x128xf32>, vector<8x128xf32> -> vector<8x128xf32>
    %c0_3 = arith.constant 0 : index
    %c0_4 = arith.constant 0 : index
    %3 = vector.load %arg2[%c0_3, %c0_4] : memref<8x4xf32, #tpu.memory_space<vmem>>, vector<8x4xf32>
    %c0_5 = arith.constant 0 : index
    %c0_6 = arith.constant 0 : index
    %4 = vector.load %arg4[%c0_5, %c0_6] : memref<4x128xf32, #tpu.memory_space<vmem>>, vector<4x128xf32>
    %cst_7 = arith.constant dense<0.000000e+00> : vector<8x128xf32>
    %5 = tpu.matmul %3, %4, %cst_7 {dimension_numbers = #tpu.dot_dimension_numbers<[1], [0], [0], [1], [0, 0, 1, 1], [], []>} : vector<8x4xf32>, vector<4x128xf32>, vector<8x128xf32> -> vector<8x128xf32>
    %6 = arith.addf %2, %5 : vector<8x128xf32>
    %c0_8 = arith.constant 0 : index
    %c0_9 = arith.constant 0 : index
    %7 = vector.load %arg5[%c0_8, %c0_9] : memref<1x128xf32, #tpu.memory_space<vmem>>, vector<1x128xf32>
    %8 = vector.broadcast %7 : vector<1x128xf32> to vector<8x128xf32>
    %9 = arith.addf %6, %8 : vector<8x128xf32>
    %cst_10 = arith.constant 0.000000e+00 : f32
    %10 = vector.broadcast %cst_10 : f32 to vector<8x128xf32>
    %11 = arith.maximumf %9, %10 : vector<8x128xf32>
    %c0_11 = arith.constant 0 : index
    %c0_12 = arith.constant 0 : index
    %12 = vector.load %arg6[%c0_11, %c0_12] : memref<128x128xf32, #tpu.memory_space<vmem>>, vector<128x128xf32>
    %cst_13 = arith.constant dense<0.000000e+00> : vector<8x128xf32>
    %13 = tpu.matmul %11, %12, %cst_13 {dimension_numbers = #tpu.dot_dimension_numbers<[1], [0], [0], [1], [0, 0, 1, 1], [], []>} : vector<8x128xf32>, vector<128x128xf32>, vector<8x128xf32> -> vector<8x128xf32>
    %c0_14 = arith.constant 0 : index
    %c0_15 = arith.constant 0 : index
    %14 = vector.load %arg7[%c0_14, %c0_15] : memref<1x128xf32, #tpu.memory_space<vmem>>, vector<1x128xf32>
    %15 = vector.broadcast %14 : vector<1x128xf32> to vector<8x128xf32>
    %16 = arith.addf %13, %15 : vector<8x128xf32>
    %c0_16 = arith.constant 0 : index
    %c0_17 = arith.constant 0 : index
    %17 = vector.load %arg8[%c0_16, %c0_17] : memref<8x128xf32, #tpu.memory_space<vmem>>, vector<8x128xf32>
    tpu.vector_store %arg8[%c0_16, %c0_17], %16 {strides = array<i32>} : memref<8x128xf32, #tpu.memory_space<vmem>>, vector<8x128xf32>,
    return
  }
  func.func @transform_0(%arg0: i32) -> (i32, i32) {
    %c0_i32 = arith.constant 0 : i32
    %c0_i32_0 = arith.constant 0 : i32
    return %arg0, %c0_i32 : i32, i32
  }
  func.func @transform_1(%arg0: i32) -> (i32, i32) {
    %c0_i32 = arith.constant 0 : i32
    %c0_i32_0 = arith.constant 0 : i32
    return %arg0, %c0_i32 : i32, i32
  }
  func.func @transform_2(%arg0: i32) -> (i32, i32) {
    %c0_i32 = arith.constant 0 : i32
    %c0_i32_0 = arith.constant 0 : i32
    %c0_i32_1 = arith.constant 0 : i32
    return %c0_i32, %c0_i32_0 : i32, i32
  }
  func.func @transform_3(%arg0: i32) -> (i32, i32) {
    %c0_i32 = arith.constant 0 : i32
    %c0_i32_0 = arith.constant 0 : i32
    %c0_i32_1 = arith.constant 0 : i32
    return %c0_i32, %c0_i32_0 : i32, i32
  }
  func.func @transform_4(%arg0: i32) -> (i32, i32) {
    %c0_i32 = arith.constant 0 : i32
    %c0_i32_0 = arith.constant 0 : i32
    %c0_i32_1 = arith.constant 0 : i32
    return %c0_i32, %c0_i32_0 : i32, i32
  }
  func.func @transform_5(%arg0: i32) -> (i32, i32) {
    %c0_i32 = arith.constant 0 : i32
    %c0_i32_0 = arith.constant 0 : i32
    %c0_i32_1 = arith.constant 0 : i32
    return %c0_i32, %c0_i32_0 : i32, i32
  }
  func.func @transform_6(%arg0: i32) -> (i32, i32) {
    %c0_i32 = arith.constant 0 : i32
    %c0_i32_0 = arith.constant 0 : i32
    %c0_i32_1 = arith.constant 0 : i32
    return %c0_i32, %c0_i32_0 : i32, i32
  }
  func.func @transform_7(%arg0: i32) -> (i32, i32) {
    %c0_i32 = arith.constant 0 : i32
    %c0_i32_0 = arith.constant 0 : i32
    return %arg0, %c0_i32 : i32, i32
  }
}

</mosaic_0001>

<llo_original>
// kernel: qvalue_forward.1
$region0: #{qvalue_forward.1}
  #allocation0 [shape = 'u32[]', space=smem, size = 0x4, offset = 0x4, fixed_abs, tag = 'smem constant byte address 0x4 - core index']
  #allocation1 [shape = 'u32[144,128]{1,0:T(1,128)}', space=vmem, size = 0x12000, scoped, tag = 'internal scratch']
  %s0 = inlined_call_operand.hbm [shape: f32[8,16], index: 0, kind: input, shape index: {}]
  %s1 = inlined_call_operand.vmem [shape: f32[8,4], index: 1, kind: input, shape index: {}]
  %s2 = inlined_call_operand.vmem [shape: f32[16,128], index: 2, kind: input, shape index: {}]
  %s3 = inlined_call_operand.vmem [shape: f32[4,128], index: 3, kind: input, shape index: {}]
  %s4 = inlined_call_operand.vmem [shape: f32[1,128], index: 4, kind: input, shape index: {}]
  %s5 = inlined_call_operand.hbm [shape: f32[128,128], index: 5, kind: input, shape index: {}]
  %s6 = inlined_call_operand.vmem [shape: f32[1,128], index: 6, kind: input, shape index: {}]
  %s7 = inlined_call_operand.vmem [shape: f32[8,128], index: 7, kind: output, shape index: {}]
  %s8 = sld [smem:[#allocation0]]
  $region46: #{qvalue_forward.1} parent=0
    _
  %s10 = ssub.s32 1, %s8
  %s11 = scalar_select 0, %s10, %s8
  $region1: #{qvalue_forward.1} parent=0
    #allocation2 [shape = 'u8[4096]{0}', space=vmem, size = 0x1000, scoped, tag = 'input window, operand 0, single buffered']
    #allocation3 [shape = 's32[1]{0}', space=sflag, size = 0x4, scoped, tag = 'scoped memory for qvalue_forward.1']
    #allocation4 [shape = 'u8[65536]{0}', space=vmem, size = 0x10000, scoped, tag = 'input window, operand 5, single buffered']
    #allocation5 [shape = 's32[1]{0}', space=sflag, size = 0x4, scoped, tag = 'scoped memory for qvalue_forward.1']
    %12 = vsyncpa [#allocation3], 0
    %13 = vsyncpa [#allocation5], 0
    // Predicated region
    $region2: #{qvalue_forward.1} parent=1 // pred_check
      _
    $region3: #{qvalue_forward.1} parent=1 // pred_check_branch
      %15 = sbr.rel (0) target = $region5
    $region4: #{qvalue_forward.1} parent=1 // pred_region
      %s17 = ssub.s32 128, 128
      %18 = vsyncadd [#allocation3], %s17
      %s20 = sshll.u32 [#allocation2], 4
      %s21 = int_to_ptr.vmem [resolvable:$true] %s20
      %23 = dma.hbm_to_vmem [thread:$0]  %s0, 128, %s21, [#allocation3]
    $region5: #{qvalue_forward.1} parent=1 // pred_fallthru
      _
    // Predicated region
    $region6: #{qvalue_forward.1} parent=1 // pred_check
      _
    $region7: #{qvalue_forward.1} parent=1 // pred_check_branch
      %25 = sbr.rel (0) target = $region9
    $region8: #{qvalue_forward.1} parent=1 // pred_region
      _
    $region9: #{qvalue_forward.1} parent=1 // pred_fallthru
      _
    // Predicated region
    $region10: #{qvalue_forward.1} parent=1 // pred_check
      _
    $region11: #{qvalue_forward.1} parent=1 // pred_check_branch
      %27 = sbr.rel (0) target = $region13
    $region12: #{qvalue_forward.1} parent=1 // pred_region
      _
    $region13: #{qvalue_forward.1} parent=1 // pred_fallthru
      _
    // Predicated region
    $region14: #{qvalue_forward.1} parent=1 // pred_check
      _
    $region15: #{qvalue_forward.1} parent=1 // pred_check_branch
      %29 = sbr.rel (0) target = $region17
    $region16: #{qvalue_forward.1} parent=1 // pred_region
      _
    $region17: #{qvalue_forward.1} parent=1 // pred_fallthru
      _
    // Predicated region
    $region18: #{qvalue_forward.1} parent=1 // pred_check
      _
    $region19: #{qvalue_forward.1} parent=1 // pred_check_branch
      %31 = sbr.rel (0) target = $region21
    $region20: #{qvalue_forward.1} parent=1 // pred_region
      _
    $region21: #{qvalue_forward.1} parent=1 // pred_fallthru
      _
    // Predicated region
    $region22: #{qvalue_forward.1} parent=1 // pred_check
      _
    $region23: #{qvalue_forward.1} parent=1 // pred_check_branch
      %33 = sbr.rel (0) target = $region25
    $region24: #{qvalue_forward.1} parent=1 // pred_region
      %s35 = ssub.s32 2048, 2048
      %36 = vsyncadd [#allocation5], %s35
      %s37 = sshll.u32 [#allocation4], 4
      %s38 = int_to_ptr.vmem [resolvable:$true] %s37
      %43 = dma.hbm_to_vmem [thread:$0]  %s5, 2048, %s38, [#allocation5], 128, 128, 8
    $region25: #{qvalue_forward.1} parent=1 // pred_fallthru
      _
    // Predicated region
    $region26: #{qvalue_forward.1} parent=1 // pred_check
      _
    $region27: #{qvalue_forward.1} parent=1 // pred_check_branch
      %45 = sbr.rel (0) target = $region29
    $region28: #{qvalue_forward.1} parent=1 // pred_region
      _
    $region29: #{qvalue_forward.1} parent=1 // pred_fallthru
      _
    // Predicated region
    $region30: #{qvalue_forward.1} parent=1 // pred_check
      _
    $region31: #{qvalue_forward.1} parent=1 // pred_check_branch
      %47 = sbr.rel (0) target = $region33
    $region32: #{qvalue_forward.1} parent=1 // pred_region
      %48 = dma.done [#allocation3], 128
    $region33: #{qvalue_forward.1} parent=1 // pred_fallthru
      _
    // Predicated region
    $region34: #{qvalue_forward.1} parent=1 // pred_check
      _
    $region35: #{qvalue_forward.1} parent=1 // pred_check_branch
      %50 = sbr.rel (0) target = $region37
    $region36: #{qvalue_forward.1} parent=1 // pred_region
      %51 = dma.done [#allocation5], 2048
    $region37: #{qvalue_forward.1} parent=1 // pred_fallthru
      _
    %v52 = vld [vmem:[#allocation2] sm:$0xff]
    %v53 = vld [vmem:[%s2] sm:$0xff]
    %v54 = vld [vmem:[%s2 + $0x8] sm:$0xff]
    %v55 = vld [vmem:[%s1] sm:$0xff]
    %v56 = vld [vmem:[%s3] sm:$0xf]
    %vm57 = vcmask 31744
    %v59 = vsel %vm57, %v55, 0
    %vm61 = vcmask 1043456
    %v63 = vsel %vm61, %v56, 0
    %65 = vmatprep.subr.mxu0 0.0
    %66 = vmatpush1.msra.mxu0 %v63
    %67 = vmatprep.subr.mxu0 0.0
    %68 = vmatpush1.msra.mxu0 0.0
    %69 = vmatprep.subr.mxu0 0.0
    %70 = vmatpush1.msra.mxu0 0.0
    %71 = vmatprep.subr.mxu0 0.0
    %72 = vmatpush1.msra.mxu0 0.0
    %73 = vmatprep.subr.mxu0 0.0
    %74 = vmatpush1.msra.mxu0 0.0
    %75 = vmatprep.subr.mxu0 0.0
    %76 = vmatpush1.msra.mxu0 0.0
    %77 = vmatprep.subr.mxu0 0.0
    %78 = vmatpush1.msra.mxu0 0.0
    %79 = vmatprep.subr.mxu0 0.0
    %80 = vmatpush1.msra.mxu0 0.0
    %81 = vmatprep.subr.mxu0 0.0
    %82 = vmatpush1.msra.mxu0 0.0
    %83 = vmatprep.subr.mxu0 0.0
    %84 = vmatpush1.msra.mxu0 0.0
    %85 = vmatprep.subr.mxu0 0.0
    %86 = vmatpush1.msra.mxu0 0.0
    %87 = vmatprep.subr.mxu0 0.0
    %88 = vmatpush1.msra.mxu0 0.0
    %89 = vmatprep.subr.mxu0 0.0
    %90 = vmatpush1.msra.mxu0 0.0
    %91 = vmatprep.subr.mxu0 0.0
    %92 = vmatpush1.msra.mxu0 0.0
    %93 = vmatprep.subr.mxu0 0.0
    %94 = vmatpush1.msra.mxu0 0.0
    %95 = vmatprep.subr.mxu0 0.0
    %96 = vmatpush1.msra.mxu0 0.0
    %97 = vmatprep.subr.mxu0 0.0
    %98 = vmatpush1.msra.mxu0 0.0
    %99 = vmatprep.subr.mxu0 0.0
    %100 = vmatpush1.msra.mxu0 0.0
    %101 = vmatprep.subr.mxu0 0.0
    %102 = vmatpush1.msra.mxu0 0.0
    %103 = vmatprep.subr.mxu0 0.0
    %104 = vmatpush1.msra.mxu0 0.0
    %105 = vmatprep.subr.mxu0 0.0
    %106 = vmatpush1.msra.mxu0 0.0
    %107 = vmatprep.subr.mxu0 0.0
    %108 = vmatpush1.msra.mxu0 0.0
    %109 = vmatprep.subr.mxu0 0.0
    %110 = vmatpush1.msra.mxu0 0.0
    %111 = vmatprep.subr.mxu0 0.0
    %112 = vmatpush1.msra.mxu0 0.0
    %113 = vmatprep.subr.mxu0 0.0
    %114 = vmatpush1.msra.mxu0 0.0
    %115 = vmatprep.subr.mxu0 0.0
    %116 = vmatpush1.msra.mxu0 0.0
    %117 = vmatprep.subr.mxu0 0.0
    %118 = vmatpush1.msra.mxu0 0.0
    %119 = vmatprep.subr.mxu0 0.0
    %120 = vmatpush1.msra.mxu0 0.0
    %121 = vmatprep.subr.mxu0 0.0
    %122 = vmatpush1.msra.mxu0 0.0
    %123 = vmatprep.subr.mxu0 0.0
    %124 = vmatpush1.msra.mxu0 0.0
    %125 = vmatprep.subr.mxu0 0.0
    %126 = vmatpush1.msra.mxu0 0.0
    %127 = vmatprep.subr.mxu0 0.0
    %128 = vmatpush1.msra.mxu0 0.0
    %129 = vmatprep.mubr.f32.mxu0 0.0
    %130 = vmatmul.mubr.f32.gmra.mrb[0].mxu0 %v59
    %v131 = vpop.f32.mrb[0].mxu0
    %v132 = vadd.f32 0.0, %v131
    %v133 = vpop.f32.mrb[0].mxu0
    %134 = vdwg.mxu0
    %vm135 = vcmask 130048
    %v137 = vsel %vm135, %v52, 0
    %139 = vmatprep.subr.mxu0 0.0
    %140 = vmatpush1.msra.mxu0 %v53
    %141 = vmatprep.subr.mxu0 0.0
    %142 = vmatpush1.msra.mxu0 %v54
    %143 = vmatprep.subr.mxu0 0.0
    %144 = vmatpush1.msra.mxu0 0.0
    %145 = vmatprep.subr.mxu0 0.0
    %146 = vmatpush1.msra.mxu0 0.0
    %147 = vmatprep.subr.mxu0 0.0
    %148 = vmatpush1.msra.mxu0 0.0
    %149 = vmatprep.subr.mxu0 0.0
    %150 = vmatpush1.msra.mxu0 0.0
    %151 = vmatprep.subr.mxu0 0.0
    %152 = vmatpush1.msra.mxu0 0.0
    %153 = vmatprep.subr.mxu0 0.0
    %154 = vmatpush1.msra.mxu0 0.0
    %155 = vmatprep.subr.mxu0 0.0
    %156 = vmatpush1.msra.mxu0 0.0
    %157 = vmatprep.subr.mxu0 0.0
    %158 = vmatpush1.msra.mxu0 0.0
    %159 = vmatprep.subr.mxu0 0.0
    %160 = vmatpush1.msra.mxu0 0.0
    %161 = vmatprep.subr.mxu0 0.0
    %162 = vmatpush1.msra.mxu0 0.0
    %163 = vmatprep.subr.mxu0 0.0
    %164 = vmatpush1.msra.mxu0 0.0
    %165 = vmatprep.subr.mxu0 0.0
    %166 = vmatpush1.msra.mxu0 0.0
    %167 = vmatprep.subr.mxu0 0.0
    %168 = vmatpush1.msra.mxu0 0.0
    %169 = vmatprep.subr.mxu0 0.0
    %170 = vmatpush1.msra.mxu0 0.0
    %171 = vmatprep.subr.mxu0 0.0
    %172 = vmatpush1.msra.mxu0 0.0
    %173 = vmatprep.subr.mxu0 0.0
    %174 = vmatpush1.msra.mxu0 0.0
    %175 = vmatprep.subr.mxu0 0.0
    %176 = vmatpush1.msra.mxu0 0.0
    %177 = vmatprep.subr.mxu0 0.0
    %178 = vmatpush1.msra.mxu0 0.0
    %179 = vmatprep.subr.mxu0 0.0
    %180 = vmatpush1.msra.mxu0 0.0
    %181 = vmatprep.subr.mxu0 0.0
    %182 = vmatpush1.msra.mxu0 0.0
    %183 = vmatprep.subr.mxu0 0.0
    %184 = vmatpush1.msra.mxu0 0.0
    %185 = vmatprep.subr.mxu0 0.0
    %186 = vmatpush1.msra.mxu0 0.0
    %187 = vmatprep.subr.mxu0 0.0
    %188 = vmatpush1.msra.mxu0 0.0
    %189 = vmatprep.subr.mxu0 0.0
    %190 = vmatpush1.msra.mxu0 0.0
    %191 = vmatprep.subr.mxu0 0.0
    %192 = vmatpush1.msra.mxu0 0.0
    %193 = vmatprep.subr.mxu0 0.0
    %194 = vmatpush1.msra.mxu0 0.0
    %195 = vmatprep.subr.mxu0 0.0
    %196 = vmatpush1.msra.mxu0 0.0
    %197 = vmatprep.subr.mxu0 0.0
    %198 = vmatpush1.msra.mxu0 0.0
    %199 = vmatprep.subr.mxu0 0.0
    %200 = vmatpush1.msra.mxu0 0.0
    %201 = vmatprep.subr.mxu0 0.0
    %202 = vmatpush1.msra.mxu0 0.0
    %203 = vmatprep.mubr.f32.mxu0 0.0
    %204 = vmatmul.mubr.f32.gmra.mrb[0].mxu0 %v137
    %v205 = vpop.f32.mrb[0].mxu0
    %v206 = vadd.f32 %v132, %v205
    %v207 = vpop.f32.mrb[0].mxu0
    %208 = vdwg.mxu0
    %v209 = vld [vmem:[%s4] sm:$0x1]
    %v211 = vlaneseq
    %v212 = vshrl.u32 %v211, 7
    %v213 = vsub.s32 0, %v212
    %v214 = vrot.slane %v209, %v213
    %v216 = vadd.f32 %v206, %v214
    %v217 = vmax.f32 %v216, 0.0
    %v218 = vld [vmem:[#allocation4] sm:$0xff]
    %v219 = vld [vmem:[#allocation4 + $0x8] sm:$0xff]
    %v220 = vld [vmem:[#allocation4 + $0x10] sm:$0xff]
    %v221 = vld [vmem:[#allocation4 + $0x18] sm:$0xff]
    %v222 = vld [vmem:[#allocation4 + $0x20] sm:$0xff]
    %v223 = vld [vmem:[#allocation4 + $0x28] sm:$0xff]
    %v224 = vld [vmem:[#allocation4 + $0x30] sm:$0xff]
    %v225 = vld [vmem:[#allocation4 + $0x38] sm:$0xff]
    %v226 = vld [vmem:[#allocation4 + $0x40] sm:$0xff]
    %v227 = vld [vmem:[#allocation4 + $0x48] sm:$0xff]
    %v228 = vld [vmem:[#allocation4 + $0x50] sm:$0xff]
    %v229 = vld [vmem:[#allocation4 + $0x58] sm:$0xff]
    %v230 = vld [vmem:[#allocation4 + $0x60] sm:$0xff]
    %v231 = vld [vmem:[#allocation4 + $0x68] sm:$0xff]
    %v232 = vld [vmem:[#allocation4 + $0x70] sm:$0xff]
    %v233 = vld [vmem:[#allocation4 + $0x78] sm:$0xff]
    %v234 = vld [vmem:[%s6] sm:$0x1]
    %v236 = vlaneseq
    %v237 = vshrl.u32 %v236, 7
    %v238 = vsub.s32 0, %v237
    %v239 = vrot.slane %v234, %v238
    %241 = vmatprep.subr.mxu0 0.0
    %242 = vmatpush1.msra.mxu0 %v218
    %243 = vmatprep.subr.mxu0 0.0
    %244 = vmatpush1.msra.mxu0 %v219
    %245 = vmatprep.subr.mxu0 0.0
    %246 = vmatpush1.msra.mxu0 %v220
    %247 = vmatprep.subr.mxu0 0.0
    %248 = vmatpush1.msra.mxu0 %v221
    %249 = vmatprep.subr.mxu0 0.0
    %250 = vmatpush1.msra.mxu0 %v222
    %251 = vmatprep.subr.mxu0 0.0
    %252 = vmatpush1.msra.mxu0 %v223
    %253 = vmatprep.subr.mxu0 0.0
    %254 = vmatpush1.msra.mxu0 %v224
    %255 = vmatprep.subr.mxu0 0.0
    %256 = vmatpush1.msra.mxu0 %v225
    %257 = vmatprep.subr.mxu0 0.0
    %258 = vmatpush1.msra.mxu0 %v226
    %259 = vmatprep.subr.mxu0 0.0
    %260 = vmatpush1.msra.mxu0 %v227
    %261 = vmatprep.subr.mxu0 0.0
    %262 = vmatpush1.msra.mxu0 %v228
    %263 = vmatprep.subr.mxu0 0.0
    %264 = vmatpush1.msra.mxu0 %v229
    %265 = vmatprep.subr.mxu0 0.0
    %266 = vmatpush1.msra.mxu0 %v230
    %267 = vmatprep.subr.mxu0 0.0
    %268 = vmatpush1.msra.mxu0 %v231
    %269 = vmatprep.subr.mxu0 0.0
    %270 = vmatpush1.msra.mxu0 %v232
    %271 = vmatprep.subr.mxu0 0.0
    %272 = vmatpush1.msra.mxu0 %v233
    %273 = vmatprep.subr.mxu0 0.0
    %274 = vmatpush1.msra.mxu0 0.0
    %275 = vmatprep.subr.mxu0 0.0
    %276 = vmatpush1.msra.mxu0 0.0
    %277 = vmatprep.subr.mxu0 0.0
    %278 = vmatpush1.msra.mxu0 0.0
    %279 = vmatprep.subr.mxu0 0.0
    %280 = vmatpush1.msra.mxu0 0.0
    %281 = vmatprep.subr.mxu0 0.0
    %282 = vmatpush1.msra.mxu0 0.0
    %283 = vmatprep.subr.mxu0 0.0
    %284 = vmatpush1.msra.mxu0 0.0
    %285 = vmatprep.subr.mxu0 0.0
    %286 = vmatpush1.msra.mxu0 0.0
    %287 = vmatprep.subr.mxu0 0.0
    %288 = vmatpush1.msra.mxu0 0.0
    %289 = vmatprep.subr.mxu0 0.0
    %290 = vmatpush1.msra.mxu0 0.0
    %291 = vmatprep.subr.mxu0 0.0
    %292 = vmatpush1.msra.mxu0 0.0
    %293 = vmatprep.subr.mxu0 0.0
    %294 = vmatpush1.msra.mxu0 0.0
    %295 = vmatprep.subr.mxu0 0.0
    %296 = vmatpush1.msra.mxu0 0.0
    %297 = vmatprep.subr.mxu0 0.0
    %298 = vmatpush1.msra.mxu0 0.0
    %299 = vmatprep.subr.mxu0 0.0
    %300 = vmatpush1.msra.mxu0 0.0
    %301 = vmatprep.subr.mxu0 0.0
    %302 = vmatpush1.msra.mxu0 0.0
    %303 = vmatprep.subr.mxu0 0.0
    %304 = vmatpush1.msra.mxu0 0.0
    %305 = vmatprep.mubr.f32.mxu0 0.0
    %306 = vmatmul.mubr.f32.gmra.mrb[0].mxu0 %v217
    %v307 = vpop.f32.mrb[0].mxu0
    %v308 = vadd.f32 %v239, %v307
    %v309 = vpop.f32.mrb[0].mxu0
    %310 = vdwg.mxu0
    %311 = vst [vmem:[%s7] sm:$0xff] %v308
    // Predicated region
    $region38: #{qvalue_forward.1} parent=1 // pred_check
      _
    $region39: #{qvalue_forward.1} parent=1 // pred_check_branch
      %313 = sbr.rel (0) target = $region41
    $region40: #{qvalue_forward.1} parent=1 // pred_region
      _
    $region41: #{qvalue_forward.1} parent=1 // pred_fallthru
      _
    // Predicated region
    $region42: #{qvalue_forward.1} parent=1 // pred_check
      _
    $region43: #{qvalue_forward.1} parent=1 // pred_check_branch
      %315 = sbr.rel (0) target = $region45
    $region44: #{qvalue_forward.1} parent=1 // pred_region
      _
    $region45: #{qvalue_forward.1} parent=1 // pred_fallthru
      _
    %316 = vsyncpa [#allocation3], 1
    %317 = vsyncpa [#allocation5], 1

</llo_original>
